<compile_context>
chip_gen: v6e
topology: v6e:2x2x1
jax: 0.10.0
libtpu: 0.0.40
codegen_flags: <defaults>
</compile_context>

<pallas_src>
import functools

import jax
import jax.numpy as jnp
from jax.experimental import pallas as pl
from jax.experimental.pallas import tpu as pltpu


def _round_up(x, m):
    return (x + m - 1) // m * m


def _sublane_multiple(dtype):
    return {4: 8, 2: 16, 1: 32}.get(jnp.dtype(dtype).itemsize, 8)


def _vmem_budget():
    """(default scoped VMEM limit, physical VMEM) -- conservative across gens."""
    phys = 64 << 20                       # v7x per-core VMEM; v5e/v6e have 128 MiB
    try:
        info = pltpu.get_tpu_info()
        phys = int(getattr(info, "vmem_capacity_bytes", phys))
    except Exception:
        pass
    return 16 << 20, phys                 # v5e default scoped limit is 16 MiB


# --------------------------------------------------------------------------
# Kernels
# --------------------------------------------------------------------------
def _mlp_fused_kernel(x_ref, w1t_ref, w2t_ref, buf_ref, o_ref):
    # fc1: h = x @ W1^T (weights pre-transposed on host -> plain MXU matmul,
    # no in-kernel XLU transpose).
    h = jnp.dot(x_ref[...], w1t_ref[...], preferred_element_type=jnp.float32)
    # fc2 (possibly only a column tile of W2^T when the N axis is split).
    y = jnp.dot(h.astype(w2t_ref.dtype), w2t_ref[...],
                preferred_element_type=jnp.float32)
    # Epilogue: + buffer (broadcast over rows), single lane-dense store.
    o_ref[...] = (y + buf_ref[...].astype(jnp.float32)).astype(o_ref.dtype)


def _mlp_ktiled_kernel(x_ref, w1t_ref, w2t_ref, buf_ref, o_ref, acc_ref):
    # Fused large-H fallback: split the intermediate feature dim.
    #   h[:, kblk]  = x @ W1^T[:, kblk]
    #   y          += h[:, kblk] @ W2^T[kblk, :]
    k = pl.program_id(1)

    @pl.when(k == 0)
    def _():
        acc_ref[...] = jnp.zeros_like(acc_ref)

    h = jnp.dot(x_ref[...], w1t_ref[...], preferred_element_type=jnp.float32)
    acc_ref[...] += jnp.dot(h.astype(w2t_ref.dtype), w2t_ref[...],
                            preferred_element_type=jnp.float32)

    @pl.when(k == pl.num_programs(1) - 1)
    def _():
        o_ref[...] = (acc_ref[...]
                      + buf_ref[...].astype(jnp.float32)).astype(o_ref.dtype)


# --------------------------------------------------------------------------
# Host-side wrappers
# --------------------------------------------------------------------------
def prepare_mlp_params(w1, w2, buffer):
    """One-time parameter prep (NOT in the per-call path).

    w1 / w2 are in PyTorch nn.Linear layout (out_features, in_features); they
    are transposed and zero-padded so the kernel does plain x @ W^T matmuls on
    (8,128)-aligned tiles.
    """
    H = w1.shape[0]
    assert w1.shape == (H, H) and w2.shape == (H, H) and buffer.shape == (H,)
    Hp = _round_up(H, 128)
    w1t = jnp.zeros((Hp, Hp), w1.dtype).at[:H, :H].set(w1.T)
    w2t = jnp.zeros((Hp, Hp), w2.dtype).at[:H, :H].set(w2.T)
    bufp = jnp.zeros((1, Hp), buffer.dtype).at[0, :H].set(buffer)
    return w1t, w2t, bufp, H


def mlp_forward(x, w1t, w2t, bufp, hidden_size, *, block_m=256, block_n=None):
    """y = fc2(fc1(x)) + buffer, with pre-prepared (padded, transposed) params."""
    B, H = x.shape
    assert H == hidden_size
    Hp = w1t.shape[0]
    dt = x.dtype
    itemsize = jnp.dtype(dt).itemsize
    sub = _sublane_multiple(dt)

    # Row tile: multiple of the dtype's sublane pack, large enough to amortize
    # per-step overhead / MXU weight pushes (tune block_m per generation).
    tm = min(_round_up(block_m, sub), _round_up(B, sub))
    Bp = _round_up(B, tm)
    m_tiles = Bp // tm

    # Optional N split: when the batch grid collapses to one step, tile W2^T /
    # the output along features so v7x's two TensorCores both get work.
    if block_n is not None and Hp % block_n == 0:
        tn = block_n
    elif m_tiles == 1 and Hp % 256 == 0:
        tn = Hp // 2
    else:
        tn = Hp
    n_tiles = Hp // tn

    # Fast path: skip activation padding / output slicing when already aligned.
    aligned = (Bp, Hp) == (B, H)
    xp = x if aligned else jnp.zeros((Bp, Hp), dt).at[:B, :H].set(x)

    default_scoped, phys_vmem = _vmem_budget()
    headroom = 8 << 20
    acc = 4  # f32 accumulator bytes
    cast_copy = tm * Hp * itemsize if itemsize < 4 else 0

    # Fused, weight-resident footprint (weights single-buffered via Buffered(1)).
    fused_vmem = (2 * tm * Hp * itemsize                         # x tiles
                  + 2 * tm * tn * itemsize                       # out tiles
                  + Hp * Hp * itemsize                           # resident W1^T
                  + (1 if n_tiles == 1 else 2) * Hp * tn * itemsize  # W2^T
                  + 2 * tn * itemsize                            # buffer row
                  + tm * Hp * acc + cast_copy                    # f32 h (+ cast)
                  + tm * tn * acc)                               # f32 y

    flops = 2 * 2 * Bp * Hp * Hp
    bytes_accessed = int(2 * Bp * Hp * itemsize                  # x in, y out
                         + 2 * Hp * Hp * jnp.dtype(w1t.dtype).itemsize
                         + Hp * jnp.dtype(bufp.dtype).itemsize)
    cost = pl.CostEstimate(flops=flops, transcendentals=0,
                           bytes_accessed=bytes_accessed)

    if fused_vmem <= phys_vmem - headroom:
        # ---- weight-resident fused path ----
        cp_kwargs = dict(dimension_semantics=("parallel", "parallel"))
        if fused_vmem > default_scoped:
            cp_kwargs["vmem_limit_bytes"] = int(
                min(fused_vmem + (4 << 20), phys_vmem - (4 << 20)))

        w1_spec = pl.BlockSpec((Hp, Hp), lambda i, j: (0, 0),
                               pipeline_mode=pl.Buffered(1))     # resident, no dbl buf
        if n_tiles == 1:
            w2_spec = pl.BlockSpec((Hp, tn), lambda i, j: (0, j),
                                   pipeline_mode=pl.Buffered(1))
        else:
            w2_spec = pl.BlockSpec((Hp, tn), lambda i, j: (0, j))

        out_p = pl.pallas_call(
            _mlp_fused_kernel,
            out_shape=jax.ShapeDtypeStruct((Bp, Hp), dt),
            grid_spec=pltpu.PrefetchScalarGridSpec(
                num_scalar_prefetch=0,
                grid=(m_tiles, n_tiles),
                in_specs=[
                    pl.BlockSpec((tm, Hp), lambda i, j: (i, 0)),   # x streams
                    w1_spec,                                       # W1^T resident
                    w2_spec,                                       # W2^T (column tile)
                    pl.BlockSpec((1, tn), lambda i, j: (0, j)),    # buffer
                ],
                out_specs=pl.BlockSpec((tm, tn), lambda i, j: (i, j)),
            ),
            compiler_params=pltpu.CompilerParams(**cp_kwargs),
            cost_estimate=cost,
        )(xp, w1t, w2t, bufp)
    else:
        # ---- large-H fallback: fused K-tiled accumulator (h stays on-chip) ----
        tk = 512 if Hp % 512 == 0 else 128
        k_tiles = Hp // tk
        ktiled_vmem = (2 * tm * Hp * itemsize            # x tiles
                       + 2 * tm * Hp * itemsize          # out tiles
                       + 2 * Hp * tk * itemsize          # W1^T k-slab (dbl buf)
                       + 2 * tk * Hp * itemsize          # W2^T k-slab (dbl buf)
                       + 2 * Hp * itemsize               # buffer row
                       + tm * Hp * acc                   # f32 accumulator scratch
                       + tm * tk * acc                   # f32 partial h
                       + (tm * tk * itemsize if itemsize < 4 else 0))
        cp_kwargs = dict(dimension_semantics=("parallel", "arbitrary"))
        if ktiled_vmem > default_scoped:
            cp_kwargs["vmem_limit_bytes"] = int(
                min(ktiled_vmem + (4 << 20), phys_vmem - (4 << 20)))

        out_p = pl.pallas_call(
            _mlp_ktiled_kernel,
            out_shape=jax.ShapeDtypeStruct((Bp, Hp), dt),
            grid_spec=pltpu.PrefetchScalarGridSpec(
                num_scalar_prefetch=0,
                grid=(m_tiles, k_tiles),
                in_specs=[
                    pl.BlockSpec((tm, Hp), lambda i, k: (i, 0)),   # x (row tile)
                    pl.BlockSpec((Hp, tk), lambda i, k: (0, k)),   # W1^T[:, kblk]
                    pl.BlockSpec((tk, Hp), lambda i, k: (k, 0)),   # W2^T[kblk, :]
                    pl.BlockSpec((1, Hp), lambda i, k: (0, 0)),    # buffer
                ],
                out_specs=pl.BlockSpec((tm, Hp), lambda i, k: (i, 0)),
                scratch_shapes=[pltpu.VMEM((tm, Hp), jnp.float32)],
            ),
            compiler_params=pltpu.CompilerParams(**cp_kwargs),
            cost_estimate=cost,
        )(xp, w1t, w2t, bufp)

    return out_p if aligned else out_p[:B, :H]


if __name__ == "__main__":
    hidden_size = 32
    batch = 8

    key = jax.random.PRNGKey(0)
    kx, k1, k2 = jax.random.split(key, 3)

    x = jax.random.normal(kx, (batch, hidden_size), dtype=jnp.float32)
    # Deterministic init mimicking nn.Linear's uniform(-1/sqrt(in), 1/sqrt(in)).
    bound = 1.0 / (hidden_size ** 0.5)
    w1 = jax.random.uniform(k1, (hidden_size, hidden_size),
                            minval=-bound, maxval=bound, dtype=jnp.float32)
    w2 = jax.random.uniform(k2, (hidden_size, hidden_size),
                            minval=-bound, maxval=bound, dtype=jnp.float32)
    buffer = jnp.ones((hidden_size,), dtype=jnp.float32)

    # One-time parameter prep (pad + transpose) -- outside the per-call path.
    w1t, w2t, bufp, H = prepare_mlp_params(w1, w2, buffer)
    fwd = jax.jit(functools.partial(mlp_forward, w1t=w1t, w2t=w2t,
                                    bufp=bufp, hidden_size=H))

    out = jax.block_until_ready(fwd(x))

    # Reference check in plain JAX (same semantics as the torch module).
    ref = (x @ w1.T) @ w2.T + buffer
    assert out.shape == (batch, hidden_size)
    assert jnp.allclose(out, ref, atol=1e-5, rtol=1e-5)

    print("KERNEL_OK")
</pallas_src>

<mosaic_0001>
module attributes {stable_mosaic.version = 11 : i64} {
  func.func @_mlp_fused_kernel(%arg0: i32, %arg1: i32, %arg2: memref<8x128xf32, #tpu.memory_space<vmem>>, %arg3: memref<128x128xf32, #tpu.memory_space<vmem>>, %arg4: memref<128x128xf32, #tpu.memory_space<vmem>>, %arg5: memref<1x128xf32, #tpu.memory_space<vmem>>, %arg6: memref<8x128xf32, #tpu.memory_space<vmem>>) attributes {dimension_semantics = [#tpu.dimension_semantics<parallel>, #tpu.dimension_semantics<parallel>], iteration_bounds = array<i64: 1, 1>, scalar_prefetch = 0 : i64, scratch_operands = 0 : i64, tpu.core_type = #tpu.core_type<tc>, window_params = [{transform_indices = @transform_0, window_bounds = array<i64: 8, 128>}, {pipeline_mode = #tpu.pipeline_mode<synchronous>, transform_indices = @transform_1, window_bounds = array<i64: 128, 128>}, {pipeline_mode = #tpu.pipeline_mode<synchronous>, transform_indices = @transform_2, window_bounds = array<i64: 128, 128>}, {transform_indices = @transform_3, window_bounds = array<i64: 1, 128>}, {transform_indices = @transform_4, window_bounds = array<i64: 8, 128>}]} {
    %c0 = arith.constant 0 : index
    %c0_0 = arith.constant 0 : index
    %0 = vector.load %arg2[%c0, %c0_0] : memref<8x128xf32, #tpu.memory_space<vmem>>, vector<8x128xf32>
    %c0_1 = arith.constant 0 : index
    %c0_2 = arith.constant 0 : index
    %1 = vector.load %arg3[%c0_1, %c0_2] : memref<128x128xf32, #tpu.memory_space<vmem>>, vector<128x128xf32>
    %cst = arith.constant dense<0.000000e+00> : vector<8x128xf32>
    %2 = tpu.matmul %0, %1, %cst {dimension_numbers = #tpu.dot_dimension_numbers<[1], [0], [0], [1], [0, 0, 1, 1], [], []>} : vector<8x128xf32>, vector<128x128xf32>, vector<8x128xf32> -> vector<8x128xf32>
    %c0_3 = arith.constant 0 : index
    %c0_4 = arith.constant 0 : index
    %3 = vector.load %arg4[%c0_3, %c0_4] : memref<128x128xf32, #tpu.memory_space<vmem>>, vector<128x128xf32>
    %cst_5 = arith.constant dense<0.000000e+00> : vector<8x128xf32>
    %4 = tpu.matmul %2, %3, %cst_5 {dimension_numbers = #tpu.dot_dimension_numbers<[1], [0], [0], [1], [0, 0, 1, 1], [], []>} : vector<8x128xf32>, vector<128x128xf32>, vector<8x128xf32> -> vector<8x128xf32>
    %c0_6 = arith.constant 0 : index
    %c0_7 = arith.constant 0 : index
    %5 = vector.load %arg5[%c0_6, %c0_7] : memref<1x128xf32, #tpu.memory_space<vmem>>, vector<1x128xf32>
    %6 = vector.broadcast %5 : vector<1x128xf32> to vector<8x128xf32>
    %7 = arith.addf %4, %6 : vector<8x128xf32>
    %c0_8 = arith.constant 0 : index
    %c0_9 = arith.constant 0 : index
    %8 = vector.load %arg6[%c0_8, %c0_9] : memref<8x128xf32, #tpu.memory_space<vmem>>, vector<8x128xf32>
    tpu.vector_store %arg6[%c0_8, %c0_9], %7 {strides = array<i32>} : memref<8x128xf32, #tpu.memory_space<vmem>>, vector<8x128xf32>,
    return
  }
  func.func @transform_0(%arg0: i32, %arg1: i32) -> (i32, i32) {
    %c0_i32 = arith.constant 0 : i32
    %c0_i32_0 = arith.constant 0 : i32
    return %arg0, %c0_i32 : i32, i32
  }
  func.func @transform_1(%arg0: i32, %arg1: i32) -> (i32, i32) {
    %c0_i32 = arith.constant 0 : i32
    %c0_i32_0 = arith.constant 0 : i32
    %c0_i32_1 = arith.constant 0 : i32
    return %c0_i32, %c0_i32_0 : i32, i32
  }
  func.func @transform_2(%arg0: i32, %arg1: i32) -> (i32, i32) {
    %c0_i32 = arith.constant 0 : i32
    %c0_i32_0 = arith.constant 0 : i32
    return %c0_i32, %arg1 : i32, i32
  }
  func.func @transform_3(%arg0: i32, %arg1: i32) -> (i32, i32) {
    %c0_i32 = arith.constant 0 : i32
    %c0_i32_0 = arith.constant 0 : i32
    return %c0_i32, %arg1 : i32, i32
  }
  func.func @transform_4(%arg0: i32, %arg1: i32) -> (i32, i32) {
    %c0_i32 = arith.constant 0 : i32
    return %arg0, %arg1 : i32, i32
  }
}

</mosaic_0001>

<llo_original>
// kernel: mlp_forward.1
$region0: #{mlp_forward.1}
  #allocation0 [shape = 'u32[]', space=smem, size = 0x4, offset = 0x4, fixed_abs, tag = 'smem constant byte address 0x4 - core index']
  #allocation1 [shape = 'u32[144,128]{1,0:T(1,128)}', space=vmem, size = 0x12000, scoped, tag = 'internal scratch']
  %s0 = inlined_call_operand.vmem [shape: f32[8,128], index: 0, kind: input, shape index: {}]
  %s1 = inlined_call_operand.hbm [shape: f32[128,128], index: 1, kind: input, shape index: {}]
  %s2 = inlined_call_operand.hbm [shape: f32[128,128], index: 2, kind: input, shape index: {}]
  %s3 = inlined_call_operand.vmem [shape: f32[1,128], index: 3, kind: input, shape index: {}]
  %s4 = inlined_call_operand.hbm [shape: f32[8,128], index: 4, kind: output, shape index: {}]
  %s5 = sld [smem:[#allocation0]]
  $region34: #{mlp_forward.1} parent=0
    _
  %s7 = ssub.s32 1, %s5
  %s8 = scalar_select 0, %s7, %s5
  $region1: #{mlp_forward.1} parent=0
    #allocation2 [shape = 'u8[65536]{0}', space=vmem, size = 0x10000, scoped, tag = 'input window, operand 1, single buffered']
    #allocation3 [shape = 's32[1]{0}', space=sflag, size = 0x4, scoped, tag = 'scoped memory for mlp_forward.1']
    #allocation4 [shape = 's32[1]{0}', space=sflag, size = 0x4, scoped, tag = 'scoped memory for mlp_forward.1']
    #allocation5 [shape = 'u8[65536]{0}', space=vmem, size = 0x10000, scoped, tag = 'input window, operand 2, single buffered']
    #allocation6 [shape = 's32[1]{0}', space=sflag, size = 0x4, scoped, tag = 'scoped memory for mlp_forward.1']
    #allocation7 [shape = 'u8[4096]{0}', space=vmem, size = 0x1000, scoped, tag = 'output window, operand 0, single buffered']
    %9 = vsyncpa [#allocation3], 0
    %10 = vsyncpa [#allocation6], 0
    %11 = vsyncpa [#allocation4], 0
    // Predicated region
    $region2: #{mlp_forward.1} parent=1 // pred_check
      _
    $region3: #{mlp_forward.1} parent=1 // pred_check_branch
      %13 = sbr.rel (0) target = $region5
    $region4: #{mlp_forward.1} parent=1 // pred_region
      _
    $region5: #{mlp_forward.1} parent=1 // pred_fallthru
      _
    // Predicated region
    $region6: #{mlp_forward.1} parent=1 // pred_check
      _
    $region7: #{mlp_forward.1} parent=1 // pred_check_branch
      %15 = sbr.rel (0) target = $region9
    $region8: #{mlp_forward.1} parent=1 // pred_region
      %s17 = ssub.s32 2048, 2048
      %18 = vsyncadd [#allocation3], %s17
      %s19 = sshll.u32 [#allocation2], 4
      %s20 = int_to_ptr.vmem [resolvable:$true] %s19
      %25 = dma.hbm_to_vmem [thread:$0]  %s1, 2048, %s20, [#allocation3], 128, 128, 8
    $region9: #{mlp_forward.1} parent=1 // pred_fallthru
      _
    // Predicated region
    $region10: #{mlp_forward.1} parent=1 // pred_check
      _
    $region11: #{mlp_forward.1} parent=1 // pred_check_branch
      %27 = sbr.rel (0) target = $region13
    $region12: #{mlp_forward.1} parent=1 // pred_region
      %s29 = ssub.s32 2048, 2048
      %30 = vsyncadd [#allocation6], %s29
      %s31 = sshll.u32 [#allocation5], 4
      %s32 = int_to_ptr.vmem [resolvable:$true] %s31
      %37 = dma.hbm_to_vmem [thread:$0]  %s2, 2048, %s32, [#allocation6], 128, 128, 8
    $region13: #{mlp_forward.1} parent=1 // pred_fallthru
      _
    // Predicated region
    $region14: #{mlp_forward.1} parent=1 // pred_check
      _
    $region15: #{mlp_forward.1} parent=1 // pred_check_branch
      %39 = sbr.rel (0) target = $region17
    $region16: #{mlp_forward.1} parent=1 // pred_region
      _
    $region17: #{mlp_forward.1} parent=1 // pred_fallthru
      _
    // Predicated region
    $region18: #{mlp_forward.1} parent=1 // pred_check
      _
    $region19: #{mlp_forward.1} parent=1 // pred_check_branch
      %41 = sbr.rel (0) target = $region21
    $region20: #{mlp_forward.1} parent=1 // pred_region
      %42 = dma.done [#allocation3], 2048
    $region21: #{mlp_forward.1} parent=1 // pred_fallthru
      _
    // Predicated region
    $region22: #{mlp_forward.1} parent=1 // pred_check
      _
    $region23: #{mlp_forward.1} parent=1 // pred_check_branch
      %44 = sbr.rel (0) target = $region25
    $region24: #{mlp_forward.1} parent=1 // pred_region
      %45 = dma.done [#allocation6], 2048
    $region25: #{mlp_forward.1} parent=1 // pred_fallthru
      _
    %v46 = vld [vmem:[%s0] sm:$0xff]
    %v47 = vld [vmem:[#allocation2] sm:$0xff]
    %v48 = vld [vmem:[#allocation2 + $0x8] sm:$0xff]
    %v49 = vld [vmem:[#allocation2 + $0x10] sm:$0xff]
    %v50 = vld [vmem:[#allocation2 + $0x18] sm:$0xff]
    %v51 = vld [vmem:[#allocation2 + $0x20] sm:$0xff]
    %v52 = vld [vmem:[#allocation2 + $0x28] sm:$0xff]
    %v53 = vld [vmem:[#allocation2 + $0x30] sm:$0xff]
    %v54 = vld [vmem:[#allocation2 + $0x38] sm:$0xff]
    %v55 = vld [vmem:[#allocation2 + $0x40] sm:$0xff]
    %v56 = vld [vmem:[#allocation2 + $0x48] sm:$0xff]
    %v57 = vld [vmem:[#allocation2 + $0x50] sm:$0xff]
    %v58 = vld [vmem:[#allocation2 + $0x58] sm:$0xff]
    %v59 = vld [vmem:[#allocation2 + $0x60] sm:$0xff]
    %v60 = vld [vmem:[#allocation2 + $0x68] sm:$0xff]
    %v61 = vld [vmem:[#allocation2 + $0x70] sm:$0xff]
    %v62 = vld [vmem:[#allocation2 + $0x78] sm:$0xff]
    %63 = vmatprep.subr.mxu0 0.0
    %64 = vmatpush1.msra.mxu0 %v62
    %65 = vmatprep.subr.mxu0 0.0
    %66 = vmatpush1.msra.mxu0 %v61
    %67 = vmatprep.subr.mxu0 0.0
    %68 = vmatpush1.msra.mxu0 %v60
    %69 = vmatprep.subr.mxu0 0.0
    %70 = vmatpush1.msra.mxu0 %v59
    %71 = vmatprep.subr.mxu0 0.0
    %72 = vmatpush1.msra.mxu0 %v58
    %73 = vmatprep.subr.mxu0 0.0
    %74 = vmatpush1.msra.mxu0 %v57
    %75 = vmatprep.subr.mxu0 0.0
    %76 = vmatpush1.msra.mxu0 %v56
    %77 = vmatprep.subr.mxu0 0.0
    %78 = vmatpush1.msra.mxu0 %v55
    %79 = vmatprep.subr.mxu0 0.0
    %80 = vmatpush1.msra.mxu0 %v54
    %81 = vmatprep.subr.mxu0 0.0
    %82 = vmatpush1.msra.mxu0 %v53
    %83 = vmatprep.subr.mxu0 0.0
    %84 = vmatpush1.msra.mxu0 %v52
    %85 = vmatprep.subr.mxu0 0.0
    %86 = vmatpush1.msra.mxu0 %v51
    %87 = vmatprep.subr.mxu0 0.0
    %88 = vmatpush1.msra.mxu0 %v50
    %89 = vmatprep.subr.mxu0 0.0
    %90 = vmatpush1.msra.mxu0 %v49
    %91 = vmatprep.subr.mxu0 0.0
    %92 = vmatpush1.msra.mxu0 %v48
    %93 = vmatprep.subr.mxu0 0.0
    %94 = vmatpush1.msra.mxu0 %v47
    %95 = vmatprep.subr.mxu0 0.0
    %96 = vmatpush2.msra.mxu0 0.0
    %97 = vmatprep.subr.mxu0 0.0
    %98 = vmatpush2.msra.mxu0 0.0
    %99 = vmatprep.subr.mxu0 0.0
    %100 = vmatpush2.msra.mxu0 0.0
    %101 = vmatprep.subr.mxu0 0.0
    %102 = vmatpush2.msra.mxu0 0.0
    %103 = vmatprep.subr.mxu0 0.0
    %104 = vmatpush2.msra.mxu0 0.0
    %105 = vmatprep.subr.mxu0 0.0
    %106 = vmatpush2.msra.mxu0 0.0
    %107 = vmatprep.subr.mxu0 0.0
    %108 = vmatpush2.msra.mxu0 0.0
    %109 = vmatprep.subr.mxu0 0.0
    %110 = vmatpush2.msra.mxu0 0.0
    %111 = vmatprep.subr.mxu0 0.0
    %112 = vmatpush2.msra.mxu0 0.0
    %113 = vmatprep.subr.mxu0 0.0
    %114 = vmatpush2.msra.mxu0 0.0
    %115 = vmatprep.subr.mxu0 0.0
    %116 = vmatpush2.msra.mxu0 0.0
    %117 = vmatprep.subr.mxu0 0.0
    %118 = vmatpush2.msra.mxu0 0.0
    %119 = vmatprep.subr.mxu0 0.0
    %120 = vmatpush2.msra.mxu0 0.0
    %121 = vmatprep.subr.mxu0 0.0
    %122 = vmatpush2.msra.mxu0 0.0
    %123 = vmatprep.subr.mxu0 0.0
    %124 = vmatpush2.msra.mxu0 0.0
    %125 = vmatprep.subr.mxu0 0.0
    %126 = vmatpush2.msra.mxu0 0.0
    %127 = vmatprep.mubr.f32.mxu0 0.0
    %128 = vmatmul.mubr.f32.gmra.mxu0 %v46
    %v129 = vpop.f32.mrf.mxu0
    %v130 = vadd.f32 0.0, %v129
    %v131 = vpop.f32.mrf.mxu0
    %132 = vdwg.mxu0
    %v133 = vld [vmem:[#allocation5] sm:$0xff]
    %v134 = vld [vmem:[#allocation5 + $0x8] sm:$0xff]
    %v135 = vld [vmem:[#allocation5 + $0x10] sm:$0xff]
    %v136 = vld [vmem:[#allocation5 + $0x18] sm:$0xff]
    %v137 = vld [vmem:[#allocation5 + $0x20] sm:$0xff]
    %v138 = vld [vmem:[#allocation5 + $0x28] sm:$0xff]
    %v139 = vld [vmem:[#allocation5 + $0x30] sm:$0xff]
    %v140 = vld [vmem:[#allocation5 + $0x38] sm:$0xff]
    %v141 = vld [vmem:[#allocation5 + $0x40] sm:$0xff]
    %v142 = vld [vmem:[#allocation5 + $0x48] sm:$0xff]
    %v143 = vld [vmem:[#allocation5 + $0x50] sm:$0xff]
    %v144 = vld [vmem:[#allocation5 + $0x58] sm:$0xff]
    %v145 = vld [vmem:[#allocation5 + $0x60] sm:$0xff]
    %v146 = vld [vmem:[#allocation5 + $0x68] sm:$0xff]
    %v147 = vld [vmem:[#allocation5 + $0x70] sm:$0xff]
    %v148 = vld [vmem:[#allocation5 + $0x78] sm:$0xff]
    %v149 = vld [vmem:[%s3] sm:$0x1]
    %v151 = vlaneseq
    %v152 = vshrl.u32 %v151, 7
    %v153 = vsub.s32 0, %v152
    %v154 = vrot.slane %v149, %v153
    %156 = vmatprep.subr.mxu0 0.0
    %157 = vmatpush1.msra.mxu0 %v148
    %158 = vmatprep.subr.mxu0 0.0
    %159 = vmatpush1.msra.mxu0 %v147
    %160 = vmatprep.subr.mxu0 0.0
    %161 = vmatpush1.msra.mxu0 %v146
    %162 = vmatprep.subr.mxu0 0.0
    %163 = vmatpush1.msra.mxu0 %v145
    %164 = vmatprep.subr.mxu0 0.0
    %165 = vmatpush1.msra.mxu0 %v144
    %166 = vmatprep.subr.mxu0 0.0
    %167 = vmatpush1.msra.mxu0 %v143
    %168 = vmatprep.subr.mxu0 0.0
    %169 = vmatpush1.msra.mxu0 %v142
    %170 = vmatprep.subr.mxu0 0.0
    %171 = vmatpush1.msra.mxu0 %v141
    %172 = vmatprep.subr.mxu0 0.0
    %173 = vmatpush1.msra.mxu0 %v140
    %174 = vmatprep.subr.mxu0 0.0
    %175 = vmatpush1.msra.mxu0 %v139
    %176 = vmatprep.subr.mxu0 0.0
    %177 = vmatpush1.msra.mxu0 %v138
    %178 = vmatprep.subr.mxu0 0.0
    %179 = vmatpush1.msra.mxu0 %v137
    %180 = vmatprep.subr.mxu0 0.0
    %181 = vmatpush1.msra.mxu0 %v136
    %182 = vmatprep.subr.mxu0 0.0
    %183 = vmatpush1.msra.mxu0 %v135
    %184 = vmatprep.subr.mxu0 0.0
    %185 = vmatpush1.msra.mxu0 %v134
    %186 = vmatprep.subr.mxu0 0.0
    %187 = vmatpush1.msra.mxu0 %v133
    %188 = vmatprep.subr.mxu0 0.0
    %189 = vmatpush2.msra.mxu0 0.0
    %190 = vmatprep.subr.mxu0 0.0
    %191 = vmatpush2.msra.mxu0 0.0
    %192 = vmatprep.subr.mxu0 0.0
    %193 = vmatpush2.msra.mxu0 0.0
    %194 = vmatprep.subr.mxu0 0.0
    %195 = vmatpush2.msra.mxu0 0.0
    %196 = vmatprep.subr.mxu0 0.0
    %197 = vmatpush2.msra.mxu0 0.0
    %198 = vmatprep.subr.mxu0 0.0
    %199 = vmatpush2.msra.mxu0 0.0
    %200 = vmatprep.subr.mxu0 0.0
    %201 = vmatpush2.msra.mxu0 0.0
    %202 = vmatprep.subr.mxu0 0.0
    %203 = vmatpush2.msra.mxu0 0.0
    %204 = vmatprep.subr.mxu0 0.0
    %205 = vmatpush2.msra.mxu0 0.0
    %206 = vmatprep.subr.mxu0 0.0
    %207 = vmatpush2.msra.mxu0 0.0
    %208 = vmatprep.subr.mxu0 0.0
    %209 = vmatpush2.msra.mxu0 0.0
    %210 = vmatprep.subr.mxu0 0.0
    %211 = vmatpush2.msra.mxu0 0.0
    %212 = vmatprep.subr.mxu0 0.0
    %213 = vmatpush2.msra.mxu0 0.0
    %214 = vmatprep.subr.mxu0 0.0
    %215 = vmatpush2.msra.mxu0 0.0
    %216 = vmatprep.subr.mxu0 0.0
    %217 = vmatpush2.msra.mxu0 0.0
    %218 = vmatprep.subr.mxu0 0.0
    %219 = vmatpush2.msra.mxu0 0.0
    %220 = vmatprep.mubr.f32.mxu0 0.0
    %221 = vmatmul.mubr.f32.gmra.mxu0 %v130
    %v222 = vpop.f32.mrf.mxu0
    %v223 = vadd.f32 %v154, %v222
    %v224 = vpop.f32.mrf.mxu0
    %225 = vdwg.mxu0
    %226 = vst [vmem:[#allocation7] sm:$0xff] %v223
    // Predicated region
    $region26: #{mlp_forward.1} parent=1 // pred_check
      _
    $region27: #{mlp_forward.1} parent=1 // pred_check_branch
      %228 = sbr.rel (0) target = $region29
    $region28: #{mlp_forward.1} parent=1 // pred_region
      %s230 = ssub.s32 128, 128
      %231 = vsyncadd [#allocation4], %s230
      %s233 = sshll.u32 [#allocation7], 4
      %s234 = int_to_ptr.vmem [resolvable:$true] %s233
      %236 = dma.vmem_to_hbm [thread:$0]  %s234, 128, %s4, [#allocation4]
    $region29: #{mlp_forward.1} parent=1 // pred_fallthru
      _
    // Predicated region
    $region30: #{mlp_forward.1} parent=1 // pred_check
      _
    $region31: #{mlp_forward.1} parent=1 // pred_check_branch
      %238 = sbr.rel (0) target = $region33
    $region32: #{mlp_forward.1} parent=1 // pred_region
      %239 = dma.done [#allocation4], 128
    $region33: #{mlp_forward.1} parent=1 // pred_fallthru
      _
    %240 = vsyncpa [#allocation3], 1
    %241 = vsyncpa [#allocation6], 1
    %242 = vsyncpa [#allocation4], 1

</llo_original>
